<compile_context>
chip_gen: v6e
topology: v6e:2x2x1
jax: 0.10.0
libtpu: 0.0.40
codegen_flags: <defaults>
</compile_context>

<pallas_src>
import jax
import jax.numpy as jnp
from jax import lax
from jax.experimental import pallas as pl
from jax.experimental.pallas import tpu as pltpu


# Budget for the pipelined input buffers (2 inputs x 2 pipeline buffers), chosen
# conservatively so the same tiling fits v5e/v6e (128 MiB VMEM) and v7x (64 MiB).
_VMEM_INPUT_BUDGET = 32 << 20
_VMEM_LIMIT_BYTES = 48 << 20


def _pick_tm(n, d, itemsize):
    """Row-tile size: multiple of 8, 512-1024 sweet spot (>=85% of HBM roofline
    per the measured tiled-add sweep), capped by the VMEM input budget and by
    (8-padded) N so tiny batches still produce a legal block."""
    per_row_bytes = 4 * d * itemsize            # 2 inputs x 2 pipeline buffers
    tm = max(8, _VMEM_INPUT_BUDGET // per_row_bytes)
    tm = min(tm, 1024)
    padded_n = ((n + 7) // 8) * 8               # don't exceed (padded) N
    tm = min(tm, padded_n)
    tm = max(8, (tm // 8) * 8)
    return tm


# ----------------------------------------------------------------------------
# Pearson path:  rst = 5 * sum((g1-m1)*(g2-m2)) / (||g1-m1|| * ||g2-m2||)
# Single-pass formulation: reduce sum, sum-of-squares, sum-of-products once and
# derive covariance / variances algebraically (no centered copies, no mean
# broadcast), then one EUP rsqrt instead of two sqrts + a divide. All VPU/XLU
# work hides under the input DMA (mem-bound regime).
# ----------------------------------------------------------------------------
def _pearson_kernel(g1_ref, g2_ref, out_ref):
    g1 = g1_ref[...].astype(jnp.float32)
    g2 = g2_ref[...].astype(jnp.float32)
    inv_d = 1.0 / g1.shape[1]

    s1 = jnp.sum(g1, axis=1, keepdims=True)
    s2 = jnp.sum(g2, axis=1, keepdims=True)
    ss1 = jnp.sum(g1 * g1, axis=1, keepdims=True)
    ss2 = jnp.sum(g2 * g2, axis=1, keepdims=True)
    sp = jnp.sum(g1 * g2, axis=1, keepdims=True)

    cov = sp - s1 * s2 * inv_d
    v1 = ss1 - s1 * s1 * inv_d
    v2 = ss2 - s2 * s2 * inv_d
    # No epsilon guard, matching the PyTorch reference (constant rows -> inf/NaN).
    out_ref[...] = 5.0 * cov * lax.rsqrt(v1 * v2)


def pearson(g1, g2):
    n, d = g1.shape
    tm = _pick_tm(n, d, jnp.dtype(g1.dtype).itemsize)
    out = pl.pallas_call(
        _pearson_kernel,
        out_shape=jax.ShapeDtypeStruct((n, 1), jnp.float32),
        grid=(pl.cdiv(n, tm),),
        in_specs=[
            pl.BlockSpec((tm, d), lambda i: (i, 0)),
            pl.BlockSpec((tm, d), lambda i: (i, 0)),
        ],
        # Output is only N floats total; the tm x 1 masked column store per tile
        # (~tm/8 vst.msk) is negligible next to ~2*tm*D/1024 input vlds, so a
        # lane-dense output relayout is not worth the in-kernel transpose.
        out_specs=pl.BlockSpec((tm, 1), lambda i: (i, 0)),
        compiler_params=pltpu.CompilerParams(
            dimension_semantics=("parallel",),
            vmem_limit_bytes=_VMEM_LIMIT_BYTES,
        ),
    )(g1, g2)
    return out[:, 0]


# ----------------------------------------------------------------------------
# Soft path:  g = cat(g1, g2, dim=1); Softmax(dim=1); ReLU; Linear(600 -> 1)
# TODO(synk): `self.score` in the reference is undefined; the only scoring layer
#             defined is self.softlayer, so that is what is implemented here.
#
# Optimizations:
#  * no concatenate: softmax statistics computed jointly over the two halves,
#    weight split into lane-dense (1, D) halves outside the kernel (avoids a
#    cross-lane relayout at the unaligned lane offset D=300).
#  * no full softmax normalization: out = dot(e, W) * recip(sum_e) + b
#    (linearity of the matvec), reciprocal on the EUP slot.
#  * 1-wide-output MXU matmul replaced by a VPU multiply + lane reduction.
#  * ReLU after softmax is a no-op and dropped.
#  * bias read from SMEM (scalar path) instead of a (1,1) VMEM tile.
# ----------------------------------------------------------------------------
def _soft_kernel(g1_ref, g2_ref, w1_ref, w2_ref, b_ref, out_ref):
    g1 = g1_ref[...].astype(jnp.float32)
    g2 = g2_ref[...].astype(jnp.float32)

    m = jnp.maximum(
        jnp.max(g1, axis=1, keepdims=True),
        jnp.max(g2, axis=1, keepdims=True),
    )
    e1 = jnp.exp(g1 - m)
    e2 = jnp.exp(g2 - m)
    sum_e = jnp.sum(e1, axis=1, keepdims=True) + jnp.sum(e2, axis=1, keepdims=True)

    w1 = w1_ref[...].astype(jnp.float32)  # (1, D), lane-dense, resident block
    w2 = w2_ref[...].astype(jnp.float32)  # (1, D), lane-dense, resident block
    s = (
        jnp.sum(e1 * w1, axis=1, keepdims=True)
        + jnp.sum(e2 * w2, axis=1, keepdims=True)
    )
    out_ref[...] = s * pl.reciprocal(sum_e, approx=True) + b_ref[0]


def soft(g1, g2, length, w, b):
    n, d = g1.shape
    # Split the (1, 2D) lane-dense weight into halves outside the kernel (trivial
    # one-time XLA slice) so the kernel never touches a non-128-aligned lane cut.
    w1 = w[:, :d]
    w2 = w[:, d:]
    tm = _pick_tm(n, d, jnp.dtype(g1.dtype).itemsize)
    out = pl.pallas_call(
        _soft_kernel,
        out_shape=jax.ShapeDtypeStruct((n, 1), jnp.float32),
        grid=(pl.cdiv(n, tm),),
        in_specs=[
            pl.BlockSpec((tm, d), lambda i: (i, 0)),
            pl.BlockSpec((tm, d), lambda i: (i, 0)),
            pl.BlockSpec((1, d), lambda i: (0, 0)),   # same block every step -> no re-DMA
            pl.BlockSpec((1, d), lambda i: (0, 0)),
            pl.BlockSpec(memory_space=pltpu.MemorySpace.SMEM),
        ],
        out_specs=pl.BlockSpec((tm, 1), lambda i: (i, 0)),
        compiler_params=pltpu.CompilerParams(
            dimension_semantics=("parallel",),
            vmem_limit_bytes=_VMEM_LIMIT_BYTES,
        ),
    )(g1, g2, w1, w2, b)
    return out[:, 0].reshape((length,))


class ScoreConstruct:
    """JAX/Pallas port of the PyTorch Score_construct module."""

    def __init__(self, score_method="pearson", feat_dim=300, key=None):
        self.score_method = score_method
        self.feat_dim = feat_dim
        if key is None:
            key = jax.random.PRNGKey(42)
        kw, kb = jax.random.split(key)
        # nn.Linear(600, 1): weight (1, 600), bias (1,).
        # Weight kept lane-dense as (1, 600); bias as a scalar (1,) array (SMEM).
        bound = 1.0 / jnp.sqrt(2.0 * feat_dim)
        self.w = jax.random.uniform(
            kw, (1, 2 * feat_dim), jnp.float32, -bound, bound
        )
        self.b = jax.random.uniform(kb, (1,), jnp.float32, -bound, bound)

    def __call__(self, g1, g2, length):
        if self.score_method == "pearson":
            return pearson(g1, g2)
        if self.score_method == "soft":
            return soft(g1, g2, length, self.w, self.b)
        raise ValueError("unknown score method")


if __name__ == "__main__":
    key = jax.random.PRNGKey(0)
    k1, k2, kp = jax.random.split(key, 3)
    N, D = 8, 300  # concat dim = 600, matching nn.Linear(600, 1)
    g1 = jax.random.normal(k1, (N, D), jnp.float32)
    g2 = jax.random.normal(k2, (N, D), jnp.float32)

    # Pearson path (config.socre_method == 'pearson')
    model_p = ScoreConstruct(score_method="pearson", feat_dim=D, key=kp)
    rst_pearson = model_p(g1, g2, N)
    jax.block_until_ready(rst_pearson)

    # Soft path (config.socre_method == 'soft')
    model_s = ScoreConstruct(score_method="soft", feat_dim=D, key=kp)
    rst_soft = model_s(g1, g2, N)
    jax.block_until_ready(rst_soft)

    # quick sanity checks against pure-JAX references
    def ref_pearson(a, b):
        ca = a - a.mean(axis=1, keepdims=True)
        cb = b - b.mean(axis=1, keepdims=True)
        num = (ca * cb).sum(axis=1)
        den = jnp.sqrt((ca * ca).sum(axis=1)) * jnp.sqrt((cb * cb).sum(axis=1))
        return 5.0 * num / den

    def ref_soft(a, b, w, bias):
        g = jnp.concatenate([a, b], axis=1)
        sm = jax.nn.softmax(g, axis=1)
        r = jnp.maximum(sm, 0.0)  # no-op, kept for exact semantics
        return jnp.sum(r * w, axis=1) + bias[0]

    assert jnp.allclose(rst_pearson, ref_pearson(g1, g2), atol=1e-4, rtol=1e-4)
    assert jnp.allclose(
        rst_soft, ref_soft(g1, g2, model_s.w, model_s.b), atol=1e-4, rtol=1e-3
    )
    assert rst_pearson.shape == (N,) and rst_soft.shape == (N,)
    print("KERNEL_OK")
</pallas_src>

<mosaic_0001>
module attributes {stable_mosaic.version = 11 : i64} {
  func.func @_pearson_kernel(%arg0: i32, %arg1: memref<8x300xf32, #tpu.memory_space<vmem>>, %arg2: memref<8x300xf32, #tpu.memory_space<vmem>>, %arg3: memref<8x1xf32, #tpu.memory_space<vmem>>) attributes {dimension_semantics = [#tpu.dimension_semantics<parallel>], iteration_bounds = array<i64: 1>, scalar_prefetch = 0 : i64, scratch_operands = 0 : i64, tpu.core_type = #tpu.core_type<tc>, window_params = [{transform_indices = @transform_0, window_bounds = array<i64: 8, 300>}, {transform_indices = @transform_1, window_bounds = array<i64: 8, 300>}, {transform_indices = @transform_2, window_bounds = array<i64: 8, 1>}]} {
    %c0 = arith.constant 0 : index
    %c0_0 = arith.constant 0 : index
    %0 = vector.load %arg1[%c0, %c0_0] : memref<8x300xf32, #tpu.memory_space<vmem>>, vector<8x300xf32>
    %c0_1 = arith.constant 0 : index
    %c0_2 = arith.constant 0 : index
    %1 = vector.load %arg2[%c0_1, %c0_2] : memref<8x300xf32, #tpu.memory_space<vmem>>, vector<8x300xf32>
    %cst = arith.constant dense<0.000000e+00> : vector<8xf32>
    %2 = vector.multi_reduction <add>, %0, %cst [1] : vector<8x300xf32> to vector<8xf32>
    %3 = vector.shape_cast %2 : vector<8xf32> to vector<8x1xf32>
    %cst_3 = arith.constant dense<0.000000e+00> : vector<8xf32>
    %4 = vector.multi_reduction <add>, %1, %cst_3 [1] : vector<8x300xf32> to vector<8xf32>
    %5 = vector.shape_cast %4 : vector<8xf32> to vector<8x1xf32>
    %6 = arith.mulf %0, %0 : vector<8x300xf32>
    %cst_4 = arith.constant dense<0.000000e+00> : vector<8xf32>
    %7 = vector.multi_reduction <add>, %6, %cst_4 [1] : vector<8x300xf32> to vector<8xf32>
    %8 = vector.shape_cast %7 : vector<8xf32> to vector<8x1xf32>
    %9 = arith.mulf %1, %1 : vector<8x300xf32>
    %cst_5 = arith.constant dense<0.000000e+00> : vector<8xf32>
    %10 = vector.multi_reduction <add>, %9, %cst_5 [1] : vector<8x300xf32> to vector<8xf32>
    %11 = vector.shape_cast %10 : vector<8xf32> to vector<8x1xf32>
    %12 = arith.mulf %0, %1 : vector<8x300xf32>
    %cst_6 = arith.constant dense<0.000000e+00> : vector<8xf32>
    %13 = vector.multi_reduction <add>, %12, %cst_6 [1] : vector<8x300xf32> to vector<8xf32>
    %14 = vector.shape_cast %13 : vector<8xf32> to vector<8x1xf32>
    %15 = arith.mulf %3, %5 : vector<8x1xf32>
    %cst_7 = arith.constant 0.00333333341 : f32
    %16 = vector.broadcast %cst_7 : f32 to vector<8x1xf32>
    %17 = arith.mulf %15, %16 : vector<8x1xf32>
    %18 = arith.subf %14, %17 : vector<8x1xf32>
    %19 = arith.mulf %3, %3 : vector<8x1xf32>
    %cst_8 = arith.constant 0.00333333341 : f32
    %20 = vector.broadcast %cst_8 : f32 to vector<8x1xf32>
    %21 = arith.mulf %19, %20 : vector<8x1xf32>
    %22 = arith.subf %8, %21 : vector<8x1xf32>
    %23 = arith.mulf %5, %5 : vector<8x1xf32>
    %cst_9 = arith.constant 0.00333333341 : f32
    %24 = vector.broadcast %cst_9 : f32 to vector<8x1xf32>
    %25 = arith.mulf %23, %24 : vector<8x1xf32>
    %26 = arith.subf %11, %25 : vector<8x1xf32>
    %cst_10 = arith.constant 5.000000e+00 : f32
    %27 = vector.broadcast %cst_10 : f32 to vector<8x1xf32>
    %28 = arith.mulf %27, %18 : vector<8x1xf32>
    %29 = arith.mulf %22, %26 : vector<8x1xf32>
    %30 = math.rsqrt %29 : vector<8x1xf32>
    %31 = arith.mulf %28, %30 : vector<8x1xf32>
    %c0_11 = arith.constant 0 : index
    %c0_12 = arith.constant 0 : index
    %32 = vector.load %arg3[%c0_11, %c0_12] : memref<8x1xf32, #tpu.memory_space<vmem>>, vector<8x1xf32>
    tpu.vector_store %arg3[%c0_11, %c0_12], %31 {strides = array<i32>} : memref<8x1xf32, #tpu.memory_space<vmem>>, vector<8x1xf32>,
    return
  }
  func.func @transform_0(%arg0: i32) -> (i32, i32) {
    %c0_i32 = arith.constant 0 : i32
    %c0_i32_0 = arith.constant 0 : i32
    return %arg0, %c0_i32 : i32, i32
  }
  func.func @transform_1(%arg0: i32) -> (i32, i32) {
    %c0_i32 = arith.constant 0 : i32
    %c0_i32_0 = arith.constant 0 : i32
    return %arg0, %c0_i32 : i32, i32
  }
  func.func @transform_2(%arg0: i32) -> (i32, i32) {
    %c0_i32 = arith.constant 0 : i32
    %c0_i32_0 = arith.constant 0 : i32
    return %arg0, %c0_i32 : i32, i32
  }
}

</mosaic_0001>

<llo_original>
// kernel: tpu_custom_call.1
$region0: #{tpu_custom_call.1}
  #allocation0 [shape = 'u32[]', space=smem, size = 0x4, offset = 0x4, fixed_abs, tag = 'smem constant byte address 0x4 - core index']
  #allocation1 [shape = 'u32[144,128]{1,0:T(1,128)}', space=vmem, size = 0x12000, scoped, tag = 'internal scratch']
  %s0 = inlined_call_operand.hbm [shape: f32[8,300], index: 0, kind: input, shape index: {}]
  %s1 = inlined_call_operand.hbm [shape: f32[8,300], index: 1, kind: input, shape index: {}]
  %s2 = inlined_call_operand.vmem [shape: f32[8,1], index: 2, kind: output, shape index: {}]
  %s3 = sld [smem:[#allocation0]]
  $region26: #{tpu_custom_call.1} parent=0
    _
  %s5 = ssub.s32 1, %s3
  %s6 = scalar_select 0, %s5, %s3
  $region1: #{tpu_custom_call.1} parent=0
    #allocation2 [shape = 'u8[12288]{0}', space=vmem, size = 0x3000, scoped, tag = 'input window, operand 0, single buffered']
    #allocation3 [shape = 's32[1]{0}', space=sflag, size = 0x4, scoped, tag = 'scoped memory for tpu_custom_call.1']
    #allocation4 [shape = 'u8[12288]{0}', space=vmem, size = 0x3000, scoped, tag = 'input window, operand 1, single buffered']
    #allocation5 [shape = 's32[1]{0}', space=sflag, size = 0x4, scoped, tag = 'scoped memory for tpu_custom_call.1']
    %7 = vsyncpa [#allocation3], 0
    %8 = vsyncpa [#allocation5], 0
    // Predicated region
    $region2: #{tpu_custom_call.1} parent=1 // pred_check
      _
    $region3: #{tpu_custom_call.1} parent=1 // pred_check_branch
      %10 = sbr.rel (0) target = $region5
    $region4: #{tpu_custom_call.1} parent=1 // pred_region
      %s12 = ssub.s32 384, 384
      %13 = vsyncadd [#allocation3], %s12
      %s15 = sshll.u32 [#allocation2], 4
      %s16 = int_to_ptr.vmem [resolvable:$true] %s15
      %18 = dma.hbm_to_vmem [thread:$0]  %s0, 384, %s16, [#allocation3]
    $region5: #{tpu_custom_call.1} parent=1 // pred_fallthru
      _
    // Predicated region
    $region6: #{tpu_custom_call.1} parent=1 // pred_check
      _
    $region7: #{tpu_custom_call.1} parent=1 // pred_check_branch
      %20 = sbr.rel (0) target = $region9
    $region8: #{tpu_custom_call.1} parent=1 // pred_region
      %s22 = ssub.s32 384, 384
      %23 = vsyncadd [#allocation5], %s22
      %s25 = sshll.u32 [#allocation4], 4
      %s26 = int_to_ptr.vmem [resolvable:$true] %s25
      %28 = dma.hbm_to_vmem [thread:$0]  %s1, 384, %s26, [#allocation5]
    $region9: #{tpu_custom_call.1} parent=1 // pred_fallthru
      _
    // Predicated region
    $region10: #{tpu_custom_call.1} parent=1 // pred_check
      _
    $region11: #{tpu_custom_call.1} parent=1 // pred_check_branch
      %30 = sbr.rel (0) target = $region13
    $region12: #{tpu_custom_call.1} parent=1 // pred_region
      %31 = dma.done [#allocation3], 384
    $region13: #{tpu_custom_call.1} parent=1 // pred_fallthru
      _
    // Predicated region
    $region14: #{tpu_custom_call.1} parent=1 // pred_check
      _
    $region15: #{tpu_custom_call.1} parent=1 // pred_check_branch
      %33 = sbr.rel (0) target = $region17
    $region16: #{tpu_custom_call.1} parent=1 // pred_region
      %34 = dma.done [#allocation5], 384
    $region17: #{tpu_custom_call.1} parent=1 // pred_fallthru
      _
    %v35 = vld [vmem:[#allocation2] sm:$0xff]
    %v36 = vld [vmem:[#allocation2 + $0x8] sm:$0xff]
    %v37 = vld [vmem:[#allocation2 + $0x10] sm:$0xff]
    %v38 = vld [vmem:[#allocation4] sm:$0xff]
    %v39 = vld [vmem:[#allocation4 + $0x8] sm:$0xff]
    %v40 = vld [vmem:[#allocation4 + $0x10] sm:$0xff]
    %v41 = vadd.f32 %v35, %v36
    %vm42 = vcmask 359424
    %v43 = vsel %vm42, %v37, 0.0
    %v44 = vadd.f32 %v41, %v43
    %45 = vadd.xlane.f32.xlu0 %v44
    %v46 = vpop.xlane.xlu0 %45
    %v47 = vadd.f32 %v38, %v39
    %v48 = vsel %vm42, %v40, 0.0
    %v49 = vadd.f32 %v47, %v48
    %50 = vadd.xlane.f32.xlu0 %v49
    %v51 = vpop.xlane.xlu0 %50
    %v52 = vmul.f32 %v35, %v35
    %v53 = vmul.f32 %v36, %v36
    %v54 = vmul.f32 %v37, %v37
    %v55 = vadd.f32 %v52, %v53
    %v56 = vsel %vm42, %v54, 0.0
    %v57 = vadd.f32 %v55, %v56
    %58 = vadd.xlane.f32.xlu0 %v57
    %v59 = vpop.xlane.xlu0 %58
    %v60 = vmul.f32 %v38, %v38
    %v61 = vmul.f32 %v39, %v39
    %v62 = vmul.f32 %v40, %v40
    %v63 = vadd.f32 %v60, %v61
    %v64 = vsel %vm42, %v62, 0.0
    %v65 = vadd.f32 %v63, %v64
    %66 = vadd.xlane.f32.xlu0 %v65
    %v67 = vpop.xlane.xlu0 %66
    %v68 = vmul.f32 %v35, %v38
    %v69 = vmul.f32 %v36, %v39
    %v70 = vmul.f32 %v37, %v40
    %v71 = vadd.f32 %v68, %v69
    %v72 = vsel %vm42, %v70, 0.0
    %v73 = vadd.f32 %v71, %v72
    %74 = vadd.xlane.f32.xlu0 %v73
    %v75 = vpop.xlane.xlu0 %74
    %v76 = vmul.f32 %v46, %v51
    %v77 = vmul.f32 %v76, 0.0033333334
    %v78 = vsub.f32 %v75, %v77
    %v79 = vmul.f32 %v46, %v46
    %v80 = vmul.f32 %v79, 0.0033333334
    %v81 = vsub.f32 %v59, %v80
    %v82 = vmul.f32 %v51, %v51
    %v83 = vmul.f32 %v82, 0.0033333334
    %v84 = vsub.f32 %v67, %v83
    %v85 = vmul.f32 %v78, 5.0
    %v86 = vmul.f32 %v81, %v84
    %v87 = vrsqrt.pop %v86
    %v88 = vmul.f32 %v85, %v87
    %vm89 = vcmask 7168
    %90 = vst.msk [vmem:[%s2] sm:$0xff] %vm89, %v88
    // Predicated region
    $region18: #{tpu_custom_call.1} parent=1 // pred_check
      _
    $region19: #{tpu_custom_call.1} parent=1 // pred_check_branch
      %92 = sbr.rel (0) target = $region21
    $region20: #{tpu_custom_call.1} parent=1 // pred_region
      _
    $region21: #{tpu_custom_call.1} parent=1 // pred_fallthru
      _
    // Predicated region
    $region22: #{tpu_custom_call.1} parent=1 // pred_check
      _
    $region23: #{tpu_custom_call.1} parent=1 // pred_check_branch
      %94 = sbr.rel (0) target = $region25
    $region24: #{tpu_custom_call.1} parent=1 // pred_region
      _
    $region25: #{tpu_custom_call.1} parent=1 // pred_fallthru
      _
    %95 = vsyncpa [#allocation3], 1
    %96 = vsyncpa [#allocation5], 1

</llo_original>
